<compile_context>
chip_gen: v5e
topology: v5e:2x2
jax: 0.10.0
libtpu: 0.0.40
codegen_flags: <defaults>
</compile_context>

<pallas_src>
import functools

import jax
import jax.numpy as jnp
from jax.experimental import pallas as pl
from jax.experimental.pallas import tpu as pltpu

LANE = 128      # last-dim tiles should be multiples of the 128-lane vreg width
SUBLANE = 8


def _round_up(n, m):
    return ((n + m - 1) // m) * m


def _leaky_relu(x, slope=0.1):
    return jnp.where(x >= 0, x, slope * x)


def mlp_kernel(x_ref, w1_ref, b1_ref, w2_ref, b2_ref, w3_ref, b3_ref, o_ref,
               *, mxu_dtype):
    """Fused Linear->LeakyReLU->Linear->LeakyReLU->Linear on one row tile."""
    # TODO(synk): Dropout(0.1) is identity in eval mode; training-mode RNG
    # masking is not implemented here.
    x = x_ref[...].astype(mxu_dtype)

    # Layer 1: Linear(input_size -> hidden) + LeakyReLU(0.1)
    h = jnp.dot(x, w1_ref[...], preferred_element_type=jnp.float32)
    h = _leaky_relu(h + b1_ref[...].astype(jnp.float32))   # activation math in f32 (VPU)

    # Layer 2: Linear(hidden -> latent) + LeakyReLU(0.1)
    h = jnp.dot(h.astype(mxu_dtype), w2_ref[...], preferred_element_type=jnp.float32)
    h = _leaky_relu(h + b2_ref[...].astype(jnp.float32))

    # out_net: Linear(latent -> latent)
    out = jnp.dot(h.astype(mxu_dtype), w3_ref[...], preferred_element_type=jnp.float32)
    out = out + b3_ref[...].astype(jnp.float32)
    o_ref[...] = out.astype(o_ref.dtype)


def audio_conv_encoder_forward(x, params, *, row_tile=512, mxu_dtype=None,
                               weight_buffer_count=None):
    """x: (B, S, input_size) -> (B, S, latent_dim).

    row_tile:            rows of (B*S) processed per grid step (sweep 256-1024).
    mxu_dtype:           operand dtype for the matmuls (e.g. jnp.bfloat16 on
                         v6e/v7x); accumulation is always f32. Defaults to x.dtype.
    weight_buffer_count: set to 1 to single-buffer the resident weights
                         (frees VMEM on v7x / large feature dims).
    """
    w1, b1, w2, b2, w3, b3 = params
    B, S, D = x.shape
    H = w1.shape[1]
    L = w2.shape[1]
    assert w1.shape == (D, H) and w2.shape == (H, L) and w3.shape == (L, L)

    mxu_dtype = jnp.dtype(x.dtype if mxu_dtype is None else mxu_dtype)

    rows = B * S
    x2d = x.reshape(rows, D)  # row-major flatten (no data movement)

    # No host-side row padding: use a cdiv grid and let Pallas mask the partial
    # last block. Clamp the tile to the real row count (multiple of 16 so it is
    # valid for both f32 and bf16 sublane packing).
    rt = max(16, min(row_tile, _round_up(rows, 16)))
    grid = (pl.cdiv(rows, rt),)

    # Lane-pad hidden/latent dims to multiples of 128 so the intermediates and
    # (especially) the output block are lane-dense. Zero padding is exact:
    # padded hidden/latent columns stay exactly 0 through bias + LeakyReLU, and
    # padded output columns are sliced off below.
    Hp = _round_up(H, LANE)
    Lp = _round_up(L, LANE)
    # NOTE: the input feature dim D is deliberately left unpadded: padding it
    # would require an extra HBM copy (and a wider read) of the (B*S, D)
    # activation tensor, which is the dominant traffic of this mem-bound MLP.
    # D equals the full array dim, so the BlockSpec is still legal.

    w1p = jnp.pad(w1, ((0, 0), (0, Hp - H))).astype(mxu_dtype)
    w2p = jnp.pad(w2, ((0, Hp - H), (0, Lp - L))).astype(mxu_dtype)
    w3p = jnp.pad(w3, ((0, Lp - L), (0, Lp - L))).astype(mxu_dtype)
    b1p = jnp.pad(b1, (0, Hp - H)).reshape(1, Hp).astype(jnp.float32)
    b2p = jnp.pad(b2, (0, Lp - L)).reshape(1, Lp).astype(jnp.float32)
    b3p = jnp.pad(b3, (0, Lp - L)).reshape(1, Lp).astype(jnp.float32)

    full = lambda i: (0, 0)  # weights/biases resident across the row grid

    def wspec(shape):
        if weight_buffer_count is None:
            return pl.BlockSpec(shape, full)
        # Constant index_map => weights never re-DMA; shrink their buffering.
        return pl.BlockSpec(shape, full,
                            pipeline_mode=pl.Buffered(weight_buffer_count))

    # Explicit VMEM budget: double-buffered x/out row blocks + resident
    # weights/biases + live f32 intermediates, with headroom.
    isz = lambda dt: jnp.dtype(dt).itemsize
    wbuf = 2 if weight_buffer_count is None else weight_buffer_count
    io_bytes = 2 * rt * (D * isz(x.dtype) + Lp * isz(x.dtype))
    w_bytes = wbuf * ((D * Hp + Hp * Lp + Lp * Lp) * isz(mxu_dtype)
                      + (Hp + 2 * Lp) * 4)
    act_bytes = 2 * rt * max(Hp, Lp) * 4
    vmem_limit = int(1.5 * (io_bytes + w_bytes + act_bytes)) + (4 << 20)
    vmem_limit = max(16 << 20, min(vmem_limit, 100 << 20))

    kernel = functools.partial(mlp_kernel, mxu_dtype=mxu_dtype)

    out2d = pl.pallas_call(
        kernel,
        out_shape=jax.ShapeDtypeStruct((rows, Lp), x.dtype),
        grid_spec=pltpu.PrefetchScalarGridSpec(
            num_scalar_prefetch=0,
            grid=grid,
            in_specs=[
                pl.BlockSpec((rt, D), lambda i: (i, 0)),
                wspec((D, Hp)),
                wspec((1, Hp)),
                wspec((Hp, Lp)),
                wspec((1, Lp)),
                wspec((Lp, Lp)),
                wspec((1, Lp)),
            ],
            out_specs=pl.BlockSpec((rt, Lp), lambda i: (i, 0)),
        ),
        compiler_params=pltpu.CompilerParams(
            # row axis is embarrassingly parallel -> shards across TCs on v7x
            dimension_semantics=("parallel",),
            vmem_limit_bytes=vmem_limit,
        ),
    )(x2d, w1p, b1p, w2p, b2p, w3p, b3p)

    return out2d[:, :L].reshape(B, S, L)


def init_params(key, input_size, hidden_size, latent_dim, dtype=jnp.float32):
    """Deterministic parameter init (PyTorch nn.Linear-style uniform)."""
    def linear(k, fan_in, fan_out):
        kw, kb = jax.random.split(k)
        bound = 1.0 / jnp.sqrt(fan_in)
        w = jax.random.uniform(kw, (fan_in, fan_out), dtype, -bound, bound)
        b = jax.random.uniform(kb, (fan_out,), dtype, -bound, bound)
        return w, b

    k1, k2, k3 = jax.random.split(key, 3)
    w1, b1 = linear(k1, input_size, hidden_size)
    w2, b2 = linear(k2, hidden_size, latent_dim)
    w3, b3 = linear(k3, latent_dim, latent_dim)
    return (w1, b1, w2, b2, w3, b3)


def reference_forward(x, params):
    """Pure-JAX reference of the PyTorch forward (eval mode)."""
    w1, b1, w2, b2, w3, b3 = params
    h = _leaky_relu(x @ w1 + b1)
    h = _leaky_relu(h @ w2 + b2)
    return h @ w3 + b3


if __name__ == "__main__":
    # Small shapes consistent with the module: (batch, seq_len, input_size)
    batch, seq_len = 2, 8
    input_size, hidden_size, latent_dim = 16, 32, 16

    key = jax.random.PRNGKey(0)
    kx, kp = jax.random.split(key)
    x = jax.random.normal(kx, (batch, seq_len, input_size), dtype=jnp.float32)
    params = init_params(kp, input_size, hidden_size, latent_dim)

    out = audio_conv_encoder_forward(x, params)
    out = jax.block_until_ready(out)

    ref = reference_forward(x, params)
    assert out.shape == (batch, seq_len, latent_dim)
    assert jnp.allclose(out, ref, atol=1e-5, rtol=1e-5)

    print("KERNEL_OK")
</pallas_src>

<mosaic_0001>
module attributes {stable_mosaic.version = 11 : i64} {
  func.func @mlp_kernel(%arg0: i32, %arg1: memref<16x16xf32, #tpu.memory_space<vmem>>, %arg2: memref<16x128xf32, #tpu.memory_space<vmem>>, %arg3: memref<1x128xf32, #tpu.memory_space<vmem>>, %arg4: memref<128x128xf32, #tpu.memory_space<vmem>>, %arg5: memref<1x128xf32, #tpu.memory_space<vmem>>, %arg6: memref<128x128xf32, #tpu.memory_space<vmem>>, %arg7: memref<1x128xf32, #tpu.memory_space<vmem>>, %arg8: memref<16x128xf32, #tpu.memory_space<vmem>>) attributes {dimension_semantics = [#tpu.dimension_semantics<parallel>], iteration_bounds = array<i64: 1>, scalar_prefetch = 0 : i64, scratch_operands = 0 : i64, tpu.core_type = #tpu.core_type<tc>, window_params = [{transform_indices = @transform_0, window_bounds = array<i64: 16, 16>}, {pipeline_mode = #tpu.pipeline_mode<synchronous>, transform_indices = @transform_1, window_bounds = array<i64: 16, 128>}, {pipeline_mode = #tpu.pipeline_mode<synchronous>, transform_indices = @transform_2, window_bounds = array<i64: 1, 128>}, {pipeline_mode = #tpu.pipeline_mode<synchronous>, transform_indices = @transform_3, window_bounds = array<i64: 128, 128>}, {pipeline_mode = #tpu.pipeline_mode<synchronous>, transform_indices = @transform_4, window_bounds = array<i64: 1, 128>}, {pipeline_mode = #tpu.pipeline_mode<synchronous>, transform_indices = @transform_5, window_bounds = array<i64: 128, 128>}, {pipeline_mode = #tpu.pipeline_mode<synchronous>, transform_indices = @transform_6, window_bounds = array<i64: 1, 128>}, {transform_indices = @transform_7, window_bounds = array<i64: 16, 128>}]} {
    %c0 = arith.constant 0 : index
    %c0_0 = arith.constant 0 : index
    %0 = vector.load %arg1[%c0, %c0_0] : memref<16x16xf32, #tpu.memory_space<vmem>>, vector<16x16xf32>
    %c0_1 = arith.constant 0 : index
    %c0_2 = arith.constant 0 : index
    %1 = vector.load %arg2[%c0_1, %c0_2] : memref<16x128xf32, #tpu.memory_space<vmem>>, vector<16x128xf32>
    %cst = arith.constant dense<0.000000e+00> : vector<16x128xf32>
    %2 = tpu.matmul %0, %1, %cst {dimension_numbers = #tpu.dot_dimension_numbers<[1], [0], [0], [1], [0, 0, 1, 1], [], []>} : vector<16x16xf32>, vector<16x128xf32>, vector<16x128xf32> -> vector<16x128xf32>
    %c0_3 = arith.constant 0 : index
    %c0_4 = arith.constant 0 : index
    %3 = vector.load %arg3[%c0_3, %c0_4] : memref<1x128xf32, #tpu.memory_space<vmem>>, vector<1x128xf32>
    %4 = vector.broadcast %3 : vector<1x128xf32> to vector<16x128xf32>
    %5 = arith.addf %2, %4 : vector<16x128xf32>
    %cst_5 = arith.constant 0.000000e+00 : f32
    %6 = vector.broadcast %cst_5 : f32 to vector<16x128xf32>
    %7 = arith.cmpf oge, %5, %6 : vector<16x128xf32>
    %cst_6 = arith.constant 1.000000e-01 : f32
    %8 = vector.broadcast %cst_6 : f32 to vector<16x128xf32>
    %9 = arith.mulf %8, %5 : vector<16x128xf32>
    %10 = arith.select %7, %5, %9 : vector<16x128xi1>, vector<16x128xf32>
    %c0_7 = arith.constant 0 : index
    %c0_8 = arith.constant 0 : index
    %11 = vector.load %arg4[%c0_7, %c0_8] : memref<128x128xf32, #tpu.memory_space<vmem>>, vector<128x128xf32>
    %cst_9 = arith.constant dense<0.000000e+00> : vector<16x128xf32>
    %12 = tpu.matmul %10, %11, %cst_9 {dimension_numbers = #tpu.dot_dimension_numbers<[1], [0], [0], [1], [0, 0, 1, 1], [], []>} : vector<16x128xf32>, vector<128x128xf32>, vector<16x128xf32> -> vector<16x128xf32>
    %c0_10 = arith.constant 0 : index
    %c0_11 = arith.constant 0 : index
    %13 = vector.load %arg5[%c0_10, %c0_11] : memref<1x128xf32, #tpu.memory_space<vmem>>, vector<1x128xf32>
    %14 = vector.broadcast %13 : vector<1x128xf32> to vector<16x128xf32>
    %15 = arith.addf %12, %14 : vector<16x128xf32>
    %cst_12 = arith.constant 0.000000e+00 : f32
    %16 = vector.broadcast %cst_12 : f32 to vector<16x128xf32>
    %17 = arith.cmpf oge, %15, %16 : vector<16x128xf32>
    %cst_13 = arith.constant 1.000000e-01 : f32
    %18 = vector.broadcast %cst_13 : f32 to vector<16x128xf32>
    %19 = arith.mulf %18, %15 : vector<16x128xf32>
    %20 = arith.select %17, %15, %19 : vector<16x128xi1>, vector<16x128xf32>
    %c0_14 = arith.constant 0 : index
    %c0_15 = arith.constant 0 : index
    %21 = vector.load %arg6[%c0_14, %c0_15] : memref<128x128xf32, #tpu.memory_space<vmem>>, vector<128x128xf32>
    %cst_16 = arith.constant dense<0.000000e+00> : vector<16x128xf32>
    %22 = tpu.matmul %20, %21, %cst_16 {dimension_numbers = #tpu.dot_dimension_numbers<[1], [0], [0], [1], [0, 0, 1, 1], [], []>} : vector<16x128xf32>, vector<128x128xf32>, vector<16x128xf32> -> vector<16x128xf32>
    %c0_17 = arith.constant 0 : index
    %c0_18 = arith.constant 0 : index
    %23 = vector.load %arg7[%c0_17, %c0_18] : memref<1x128xf32, #tpu.memory_space<vmem>>, vector<1x128xf32>
    %24 = vector.broadcast %23 : vector<1x128xf32> to vector<16x128xf32>
    %25 = arith.addf %22, %24 : vector<16x128xf32>
    %c0_19 = arith.constant 0 : index
    %c0_20 = arith.constant 0 : index
    %26 = vector.load %arg8[%c0_19, %c0_20] : memref<16x128xf32, #tpu.memory_space<vmem>>, vector<16x128xf32>
    tpu.vector_store %arg8[%c0_19, %c0_20], %25 {strides = array<i32>} : memref<16x128xf32, #tpu.memory_space<vmem>>, vector<16x128xf32>,
    return
  }
  func.func @transform_0(%arg0: i32) -> (i32, i32) {
    %c0_i32 = arith.constant 0 : i32
    %c0_i32_0 = arith.constant 0 : i32
    return %arg0, %c0_i32 : i32, i32
  }
  func.func @transform_1(%arg0: i32) -> (i32, i32) {
    %c0_i32 = arith.constant 0 : i32
    %c0_i32_0 = arith.constant 0 : i32
    %c0_i32_1 = arith.constant 0 : i32
    return %c0_i32, %c0_i32_0 : i32, i32
  }
  func.func @transform_2(%arg0: i32) -> (i32, i32) {
    %c0_i32 = arith.constant 0 : i32
    %c0_i32_0 = arith.constant 0 : i32
    %c0_i32_1 = arith.constant 0 : i32
    return %c0_i32, %c0_i32_0 : i32, i32
  }
  func.func @transform_3(%arg0: i32) -> (i32, i32) {
    %c0_i32 = arith.constant 0 : i32
    %c0_i32_0 = arith.constant 0 : i32
    %c0_i32_1 = arith.constant 0 : i32
    return %c0_i32, %c0_i32_0 : i32, i32
  }
  func.func @transform_4(%arg0: i32) -> (i32, i32) {
    %c0_i32 = arith.constant 0 : i32
    %c0_i32_0 = arith.constant 0 : i32
    %c0_i32_1 = arith.constant 0 : i32
    return %c0_i32, %c0_i32_0 : i32, i32
  }
  func.func @transform_5(%arg0: i32) -> (i32, i32) {
    %c0_i32 = arith.constant 0 : i32
    %c0_i32_0 = arith.constant 0 : i32
    %c0_i32_1 = arith.constant 0 : i32
    return %c0_i32, %c0_i32_0 : i32, i32
  }
  func.func @transform_6(%arg0: i32) -> (i32, i32) {
    %c0_i32 = arith.constant 0 : i32
    %c0_i32_0 = arith.constant 0 : i32
    %c0_i32_1 = arith.constant 0 : i32
    return %c0_i32, %c0_i32_0 : i32, i32
  }
  func.func @transform_7(%arg0: i32) -> (i32, i32) {
    %c0_i32 = arith.constant 0 : i32
    %c0_i32_0 = arith.constant 0 : i32
    return %arg0, %c0_i32 : i32, i32
  }
}

</mosaic_0001>

<llo_original>
// kernel: tpu_custom_call.1
$region0: #{tpu_custom_call.1}
  #allocation0 [shape = 'u32[]', space=smem, size = 0x4, offset = 0x4, fixed_abs, tag = 'smem constant byte address 0x4 - core index']
  #allocation1 [shape = 'u32[72,128]{1,0:T(1,128)}', space=vmem, size = 0x9000, scoped, tag = 'internal scratch']
  %s0 = inlined_call_operand.hbm [shape: f32[16,16], index: 0, kind: input, shape index: {}]
  %s1 = inlined_call_operand.hbm [shape: f32[16,128], index: 1, kind: input, shape index: {}]
  %s2 = inlined_call_operand.vmem [shape: f32[1,128], index: 2, kind: input, shape index: {}]
  %s3 = inlined_call_operand.hbm [shape: f32[128,128], index: 3, kind: input, shape index: {}]
  %s4 = inlined_call_operand.vmem [shape: f32[1,128], index: 4, kind: input, shape index: {}]
  %s5 = inlined_call_operand.hbm [shape: f32[128,128], index: 5, kind: input, shape index: {}]
  %s6 = inlined_call_operand.vmem [shape: f32[1,128], index: 6, kind: input, shape index: {}]
  %s7 = inlined_call_operand.hbm [shape: f32[16,128], index: 7, kind: output, shape index: {}]
  %s8 = sld [smem:[#allocation0]]
  $region54: #{tpu_custom_call.1} parent=0
    _
  %s10 = ssub.s32 1, %s8
  %s11 = scalar_select 0, %s10, %s8
  $region1: #{tpu_custom_call.1} parent=0
    #allocation2 [shape = 'u8[8192]{0}', space=vmem, size = 0x2000, scoped, tag = 'input window, operand 0, single buffered']
    #allocation3 [shape = 's32[1]{0}', space=sflag, size = 0x4, scoped, tag = 'scoped memory for tpu_custom_call.1']
    #allocation4 [shape = 's32[1]{0}', space=sflag, size = 0x4, scoped, tag = 'scoped memory for tpu_custom_call.1']
    #allocation5 [shape = 'u8[8192]{0}', space=vmem, size = 0x2000, scoped, tag = 'input window, operand 1, single buffered']
    #allocation6 [shape = 's32[1]{0}', space=sflag, size = 0x4, scoped, tag = 'scoped memory for tpu_custom_call.1']
    #allocation7 [shape = 'u8[65536]{0}', space=vmem, size = 0x10000, scoped, tag = 'input window, operand 3, single buffered']
    #allocation8 [shape = 'u8[65536]{0}', space=vmem, size = 0x10000, scoped, tag = 'input window, operand 5, single buffered']
    #allocation9 [shape = 's32[1]{0}', space=sflag, size = 0x4, scoped, tag = 'scoped memory for tpu_custom_call.1']
    #allocation10 [shape = 'u8[8192]{0}', space=vmem, size = 0x2000, scoped, tag = 'output window, operand 0, single buffered']
    %12 = vsyncpa [#allocation3], 0
    %13 = vsyncpa [#allocation6], 0
    %14 = vsyncpa [#allocation9], 0
    %15 = vsyncpa [#allocation4], 0
    // Predicated region
    $region2: #{tpu_custom_call.1} parent=1 // pred_check
      _
    $region3: #{tpu_custom_call.1} parent=1 // pred_check_branch
      %17 = sbr.rel (0) target = $region5
    $region4: #{tpu_custom_call.1} parent=1 // pred_region
      %19 = vsyncadd [#allocation3], 0
      %s20 = sshll.u32 %s0, 4
      %s21 = int_to_ptr.hbm [resolvable:$true] %s20
      %s22 = sshll.u32 [#allocation2], 4
      %s23 = int_to_ptr.vmem [resolvable:$true] %s22
      %28 = dma.hbm_to_vmem [thread:$0]  %s21, 256, %s23, [#allocation3], 128, 128, 8
    $region5: #{tpu_custom_call.1} parent=1 // pred_fallthru
      _
    // Predicated region
    $region6: #{tpu_custom_call.1} parent=1 // pred_check
      _
    $region7: #{tpu_custom_call.1} parent=1 // pred_check_branch
      %30 = sbr.rel (0) target = $region9
    $region8: #{tpu_custom_call.1} parent=1 // pred_region
      %32 = vsyncadd [#allocation6], 0
      %s33 = sshll.u32 %s1, 4
      %s34 = int_to_ptr.hbm [resolvable:$true] %s33
      %s35 = sshll.u32 [#allocation5], 4
      %s36 = int_to_ptr.vmem [resolvable:$true] %s35
      %41 = dma.hbm_to_vmem [thread:$0]  %s34, 256, %s36, [#allocation6], 128, 128, 8
    $region9: #{tpu_custom_call.1} parent=1 // pred_fallthru
      _
    // Predicated region
    $region10: #{tpu_custom_call.1} parent=1 // pred_check
      _
    $region11: #{tpu_custom_call.1} parent=1 // pred_check_branch
      %43 = sbr.rel (0) target = $region13
    $region12: #{tpu_custom_call.1} parent=1 // pred_region
      _
    $region13: #{tpu_custom_call.1} parent=1 // pred_fallthru
      _
    // Predicated region
    $region14: #{tpu_custom_call.1} parent=1 // pred_check
      _
    $region15: #{tpu_custom_call.1} parent=1 // pred_check_branch
      %45 = sbr.rel (0) target = $region17
    $region16: #{tpu_custom_call.1} parent=1 // pred_region
      %47 = vsyncadd [#allocation6], 0
      %s48 = sshll.u32 %s3, 4
      %s49 = int_to_ptr.hbm [resolvable:$true] %s48
      %s50 = sshll.u32 [#allocation7], 4
      %s51 = int_to_ptr.vmem [resolvable:$true] %s50
      %56 = dma.hbm_to_vmem [thread:$0]  %s49, 2048, %s51, [#allocation6], 128, 128, 8
    $region17: #{tpu_custom_call.1} parent=1 // pred_fallthru
      _
    // Predicated region
    $region18: #{tpu_custom_call.1} parent=1 // pred_check
      _
    $region19: #{tpu_custom_call.1} parent=1 // pred_check_branch
      %58 = sbr.rel (0) target = $region21
    $region20: #{tpu_custom_call.1} parent=1 // pred_region
      _
    $region21: #{tpu_custom_call.1} parent=1 // pred_fallthru
      _
    // Predicated region
    $region22: #{tpu_custom_call.1} parent=1 // pred_check
      _
    $region23: #{tpu_custom_call.1} parent=1 // pred_check_branch
      %60 = sbr.rel (0) target = $region25
    $region24: #{tpu_custom_call.1} parent=1 // pred_region
      %62 = vsyncadd [#allocation9], 0
      %s63 = sshll.u32 %s5, 4
      %s64 = int_to_ptr.hbm [resolvable:$true] %s63
      %s65 = sshll.u32 [#allocation8], 4
      %s66 = int_to_ptr.vmem [resolvable:$true] %s65
      %71 = dma.hbm_to_vmem [thread:$0]  %s64, 2048, %s66, [#allocation9], 128, 128, 8
    $region25: #{tpu_custom_call.1} parent=1 // pred_fallthru
      _
    // Predicated region
    $region26: #{tpu_custom_call.1} parent=1 // pred_check
      _
    $region27: #{tpu_custom_call.1} parent=1 // pred_check_branch
      %73 = sbr.rel (0) target = $region29
    $region28: #{tpu_custom_call.1} parent=1 // pred_region
      _
    $region29: #{tpu_custom_call.1} parent=1 // pred_fallthru
      _
    // Predicated region
    $region30: #{tpu_custom_call.1} parent=1 // pred_check
      _
    $region31: #{tpu_custom_call.1} parent=1 // pred_check_branch
      %75 = sbr.rel (0) target = $region33
    $region32: #{tpu_custom_call.1} parent=1 // pred_region
      %77 = dma.done [#allocation3], 256
    $region33: #{tpu_custom_call.1} parent=1 // pred_fallthru
      _
    // Predicated region
    $region34: #{tpu_custom_call.1} parent=1 // pred_check
      _
    $region35: #{tpu_custom_call.1} parent=1 // pred_check_branch
      %79 = sbr.rel (0) target = $region37
    $region36: #{tpu_custom_call.1} parent=1 // pred_region
      %81 = dma.done [#allocation6], 256
    $region37: #{tpu_custom_call.1} parent=1 // pred_fallthru
      _
    // Predicated region
    $region38: #{tpu_custom_call.1} parent=1 // pred_check
      _
    $region39: #{tpu_custom_call.1} parent=1 // pred_check_branch
      %83 = sbr.rel (0) target = $region41
    $region40: #{tpu_custom_call.1} parent=1 // pred_region
      %85 = dma.done [#allocation6], 2048
    $region41: #{tpu_custom_call.1} parent=1 // pred_fallthru
      _
    // Predicated region
    $region42: #{tpu_custom_call.1} parent=1 // pred_check
      _
    $region43: #{tpu_custom_call.1} parent=1 // pred_check_branch
      %87 = sbr.rel (0) target = $region45
    $region44: #{tpu_custom_call.1} parent=1 // pred_region
      %89 = dma.done [#allocation9], 2048
    $region45: #{tpu_custom_call.1} parent=1 // pred_fallthru
      _
    %v90 = vld [vmem:[#allocation2] sm:$0xff]
    %v91 = vld [vmem:[#allocation2 + $0x8] sm:$0xff]
    %v92 = vld [vmem:[#allocation5] sm:$0xff]
    %v93 = vld [vmem:[#allocation5 + $0x8] sm:$0xff]
    %v94 = vld [vmem:[%s2] sm:$0x1]
    %v96 = vperm.slane %v94, 0
    %vm98 = vcmask 130048
    %v100 = vsel %vm98, %v90, 0
    %v103 = vsel %vm98, %v91, 0
    %105 = vmatpush.msra.mxu0 0.0
    %106 = vmatpush.msra.mxu0 0.0
    %107 = vmatpush.msra.mxu0 0.0
    %108 = vmatpush.msra.mxu0 0.0
    %109 = vmatpush.msra.mxu0 0.0
    %110 = vmatpush.msra.mxu0 0.0
    %111 = vmatpush.msra.mxu0 0.0
    %112 = vmatpush.msra.mxu0 0.0
    %113 = vmatpush.msra.mxu0 0.0
    %114 = vmatpush.msra.mxu0 0.0
    %115 = vmatpush.msra.mxu0 0.0
    %116 = vmatpush.msra.mxu0 0.0
    %117 = vmatpush.msra.mxu0 0.0
    %118 = vmatpush.msra.mxu0 0.0
    %119 = vmatpush.msra.mxu0 %v93
    %120 = vmatpush.msra.mxu0 %v92
    %121 = vmatmul.f32.gmra.mxu0 %v100
    %v122 = vpop.f32.mrf.mxu0
    %v123 = vadd.f32 %v96, %v122
    %124 = vmatmul.f32.gmra.mxu0 %v103
    %v125 = vpop.f32.mrf.mxu0
    %v126 = vadd.f32 %v96, %v125
    %127 = vdwg.mxu0
    %vm128 = vcmp.ge.f32.partialorder %v123, 0.0
    %vm129 = vcmp.ge.f32.partialorder %v126, 0.0
    %v130 = vmul.f32 %v123, 0.1
    %v131 = vmul.f32 %v126, 0.1
    %v132 = vsel %vm128, %v123, %v130
    %v133 = vsel %vm129, %v126, %v131
    %v134 = vld [vmem:[#allocation7] sm:$0xff]
    %v135 = vld [vmem:[#allocation7 + $0x8] sm:$0xff]
    %v136 = vld [vmem:[#allocation7 + $0x10] sm:$0xff]
    %v137 = vld [vmem:[#allocation7 + $0x18] sm:$0xff]
    %v138 = vld [vmem:[#allocation7 + $0x20] sm:$0xff]
    %v139 = vld [vmem:[#allocation7 + $0x28] sm:$0xff]
    %v140 = vld [vmem:[#allocation7 + $0x30] sm:$0xff]
    %v141 = vld [vmem:[#allocation7 + $0x38] sm:$0xff]
    %v142 = vld [vmem:[#allocation7 + $0x40] sm:$0xff]
    %v143 = vld [vmem:[#allocation7 + $0x48] sm:$0xff]
    %v144 = vld [vmem:[#allocation7 + $0x50] sm:$0xff]
    %v145 = vld [vmem:[#allocation7 + $0x58] sm:$0xff]
    %v146 = vld [vmem:[#allocation7 + $0x60] sm:$0xff]
    %v147 = vld [vmem:[#allocation7 + $0x68] sm:$0xff]
    %v148 = vld [vmem:[#allocation7 + $0x70] sm:$0xff]
    %v149 = vld [vmem:[#allocation7 + $0x78] sm:$0xff]
    %v150 = vld [vmem:[%s4] sm:$0x1]
    %v152 = vperm.slane %v150, 0
    %154 = vmatpush.msra.mxu0 %v149
    %155 = vmatpush.msra.mxu0 %v148
    %156 = vmatpush.msra.mxu0 %v147
    %157 = vmatpush.msra.mxu0 %v146
    %158 = vmatpush.msra.mxu0 %v145
    %159 = vmatpush.msra.mxu0 %v144
    %160 = vmatpush.msra.mxu0 %v143
    %161 = vmatpush.msra.mxu0 %v142
    %162 = vmatpush.msra.mxu0 %v141
    %163 = vmatpush.msra.mxu0 %v140
    %164 = vmatpush.msra.mxu0 %v139
    %165 = vmatpush.msra.mxu0 %v138
    %166 = vmatpush.msra.mxu0 %v137
    %167 = vmatpush.msra.mxu0 %v136
    %168 = vmatpush.msra.mxu0 %v135
    %169 = vmatpush.msra.mxu0 %v134
    %170 = vmatmul.f32.gmra.mxu0 %v132
    %v171 = vpop.f32.mrf.mxu0
    %v172 = vadd.f32 %v152, %v171
    %173 = vmatmul.f32.gmra.mxu0 %v133
    %v174 = vpop.f32.mrf.mxu0
    %v175 = vadd.f32 %v152, %v174
    %176 = vdwg.mxu0
    %vm177 = vcmp.ge.f32.partialorder %v172, 0.0
    %vm178 = vcmp.ge.f32.partialorder %v175, 0.0
    %v179 = vmul.f32 %v172, 0.1
    %v180 = vmul.f32 %v175, 0.1
    %v181 = vsel %vm177, %v172, %v179
    %v182 = vsel %vm178, %v175, %v180
    %v183 = vld [vmem:[#allocation8] sm:$0xff]
    %v184 = vld [vmem:[#allocation8 + $0x8] sm:$0xff]
    %v185 = vld [vmem:[#allocation8 + $0x10] sm:$0xff]
    %v186 = vld [vmem:[#allocation8 + $0x18] sm:$0xff]
    %v187 = vld [vmem:[#allocation8 + $0x20] sm:$0xff]
    %v188 = vld [vmem:[#allocation8 + $0x28] sm:$0xff]
    %v189 = vld [vmem:[#allocation8 + $0x30] sm:$0xff]
    %v190 = vld [vmem:[#allocation8 + $0x38] sm:$0xff]
    %v191 = vld [vmem:[#allocation8 + $0x40] sm:$0xff]
    %v192 = vld [vmem:[#allocation8 + $0x48] sm:$0xff]
    %v193 = vld [vmem:[#allocation8 + $0x50] sm:$0xff]
    %v194 = vld [vmem:[#allocation8 + $0x58] sm:$0xff]
    %v195 = vld [vmem:[#allocation8 + $0x60] sm:$0xff]
    %v196 = vld [vmem:[#allocation8 + $0x68] sm:$0xff]
    %v197 = vld [vmem:[#allocation8 + $0x70] sm:$0xff]
    %v198 = vld [vmem:[#allocation8 + $0x78] sm:$0xff]
    %v199 = vld [vmem:[%s6] sm:$0x1]
    %v201 = vperm.slane %v199, 0
    %203 = vmatpush.msra.mxu0 %v198
    %204 = vmatpush.msra.mxu0 %v197
    %205 = vmatpush.msra.mxu0 %v196
    %206 = vmatpush.msra.mxu0 %v195
    %207 = vmatpush.msra.mxu0 %v194
    %208 = vmatpush.msra.mxu0 %v193
    %209 = vmatpush.msra.mxu0 %v192
    %210 = vmatpush.msra.mxu0 %v191
    %211 = vmatpush.msra.mxu0 %v190
    %212 = vmatpush.msra.mxu0 %v189
    %213 = vmatpush.msra.mxu0 %v188
    %214 = vmatpush.msra.mxu0 %v187
    %215 = vmatpush.msra.mxu0 %v186
    %216 = vmatpush.msra.mxu0 %v185
    %217 = vmatpush.msra.mxu0 %v184
    %218 = vmatpush.msra.mxu0 %v183
    %219 = vmatmul.f32.gmra.mxu0 %v181
    %v220 = vpop.f32.mrf.mxu0
    %v221 = vadd.f32 %v201, %v220
    %222 = vmatmul.f32.gmra.mxu0 %v182
    %v223 = vpop.f32.mrf.mxu0
    %v224 = vadd.f32 %v201, %v223
    %225 = vdwg.mxu0
    %226 = vst [vmem:[#allocation10] sm:$0xff] %v221
    %227 = vst [vmem:[#allocation10 + $0x8] sm:$0xff] %v224
    // Predicated region
    $region46: #{tpu_custom_call.1} parent=1 // pred_check
      _
    $region47: #{tpu_custom_call.1} parent=1 // pred_check_branch
      %229 = sbr.rel (0) target = $region49
    $region48: #{tpu_custom_call.1} parent=1 // pred_region
      %231 = vsyncadd [#allocation4], 0
      %s232 = sshll.u32 [#allocation10], 4
      %s233 = int_to_ptr.vmem [resolvable:$true] %s232
      %s234 = sshll.u32 %s7, 4
      %s235 = int_to_ptr.hbm [resolvable:$true] %s234
      %240 = dma.vmem_to_hbm [thread:$0]  %s233, 256, %s235, [#allocation4], 128, 128, 8
    $region49: #{tpu_custom_call.1} parent=1 // pred_fallthru
      _
    // Predicated region
    $region50: #{tpu_custom_call.1} parent=1 // pred_check
      _
    $region51: #{tpu_custom_call.1} parent=1 // pred_check_branch
      %242 = sbr.rel (0) target = $region53
    $region52: #{tpu_custom_call.1} parent=1 // pred_region
      %244 = dma.done [#allocation4], 256
    $region53: #{tpu_custom_call.1} parent=1 // pred_fallthru
      _
    %245 = vsyncpa [#allocation3], 1
    %246 = vsyncpa [#allocation6], 1
    %247 = vsyncpa [#allocation9], 1
    %248 = vsyncpa [#allocation4], 1

</llo_original>
